<compile_context>
chip_gen: v7x
topology: tpu7x:2x2x1
jax: 0.10.0
libtpu: 0.0.40
codegen_flags: <defaults>
</compile_context>

<pallas_src>
import functools

import jax
import jax.numpy as jnp
from jax.experimental import pallas as pl
from jax.experimental.pallas import tpu as pltpu


def _round_up(x, m):
    return ((x + m - 1) // m) * m


def _mlp_kernel(n_feature, n_hidden, n_out, r1, xT_ref, p_ref, oT_ref):
    # xT: (n_feature, Bp)
    # p : (r1 + round_up(n_out,8), 128) packed parameter buffer:
    #       p[:n_hidden, :n_feature]            = W1   (n_hidden, n_feature)
    #       p[:n_hidden, n_feature]             = b1
    #       p[r1:r1+n_out, :n_hidden]           = W2   (n_out, n_hidden)
    #       p[r1:r1+n_out, n_hidden]            = b2
    # oT: (n_out, Bp)
    xT = xT_ref[...]

    # --- Layer 1: h^T = W1 @ x^T + b1, as VPU FMAs (K is tiny). -----------
    # b1 folded into the accumulator init; static unroll over n_feature.
    hT = (p_ref[0:n_hidden, 0:1] * xT[0:1, :]
          + p_ref[0:n_hidden, n_feature:n_feature + 1])
    for k in range(1, n_feature):
        hT = hT + p_ref[0:n_hidden, k:k + 1] * xT[k:k + 1, :]
    hT = jnp.maximum(hT, 0.0)                                    # ReLU

    # --- Layer 2: out^T = W2 @ h^T + b2, on the MXU (K = n_hidden). -------
    w2 = p_ref[r1:r1 + n_out, 0:n_hidden]                        # (n_out, n_hidden)
    b2 = p_ref[r1:r1 + n_out, n_hidden:n_hidden + 1]             # (n_out, 1)
    oT = jnp.dot(w2, hT, preferred_element_type=jnp.float32)
    oT_ref[...] = (oT + b2).astype(oT_ref.dtype)


def pack_params(w1, b1, w2, b2):
    """Pack PyTorch-layout Linear params into one (40, 128) f32 VMEM buffer."""
    n_hidden, n_feature = w1.shape
    n_out = w2.shape[0]
    r1 = _round_up(n_hidden, 8)
    r2 = _round_up(n_out, 8)
    p = jnp.zeros((r1 + r2, 128), jnp.float32)
    p = p.at[:n_hidden, :n_feature].set(w1.astype(jnp.float32))
    p = p.at[:n_hidden, n_feature].set(b1.astype(jnp.float32))
    p = p.at[r1:r1 + n_out, :n_hidden].set(w2.astype(jnp.float32))
    p = p.at[r1:r1 + n_out, n_hidden].set(b2.astype(jnp.float32))
    return p


@functools.partial(jax.jit, static_argnames=("n_hidden", "n_out"))
def net_forward(x, packed_params, *, n_hidden, n_out):
    """x: (B, n_feature); packed_params from pack_params() -> (B, n_out)."""
    B, n_feature = x.shape
    r1 = _round_up(n_hidden, 8)

    # Pad batch to a multiple of 128 (lane axis in the transposed layout).
    LANE = 128
    Bp = _round_up(B, LANE)
    xT = jnp.pad(x.astype(jnp.float32).T, ((0, 0), (0, Bp - B)))

    kernel = functools.partial(_mlp_kernel, n_feature, n_hidden, n_out, r1)
    vmem = pl.BlockSpec(memory_space=pltpu.MemorySpace.VMEM)

    flops = 2 * B * n_feature * n_hidden + 2 * B * n_hidden * n_out
    bytes_accessed = 4 * (xT.size + packed_params.size + n_out * Bp)

    oT = pl.pallas_call(
        kernel,
        out_shape=jax.ShapeDtypeStruct((n_out, Bp), jnp.float32),
        in_specs=[vmem, vmem],
        out_specs=vmem,
        compiler_params=pltpu.CompilerParams(
            # Fuse the pad/transpose of x into the custom call's operand.
            allow_input_fusion=[True, False],
        ),
        cost_estimate=pl.CostEstimate(
            flops=flops, transcendentals=0, bytes_accessed=bytes_accessed
        ),
    )(xT, packed_params)

    # Slice padding off and return in the original (B, n_out) layout
    # (tiny fused op inside the same jit executable).
    return oT[:, :B].T


def init_params(key, n_feature, n_hidden, n_out):
    """PyTorch nn.Linear default init (U[-1/sqrt(fan_in), 1/sqrt(fan_in)]),
       weights stored in PyTorch layout (out_features, in_features)."""
    k1, k2, k3, k4 = jax.random.split(key, 4)
    bound1 = 1.0 / jnp.sqrt(n_feature)
    bound2 = 1.0 / jnp.sqrt(n_hidden)
    w1 = jax.random.uniform(k1, (n_hidden, n_feature), jnp.float32, -bound1, bound1)
    b1 = jax.random.uniform(k2, (n_hidden,), jnp.float32, -bound1, bound1)
    w2 = jax.random.uniform(k3, (n_out, n_hidden), jnp.float32, -bound2, bound2)
    b2 = jax.random.uniform(k4, (n_out,), jnp.float32, -bound2, bound2)
    return w1, b1, w2, b2


if __name__ == "__main__":
    # Mirror the data-generation in the PyTorch script:
    # two 100x2 gaussian blobs centered at +2 and -2, concatenated -> (200, 2).
    key = jax.random.PRNGKey(0)
    k_data0, k_data1, k_params = jax.random.split(key, 3)

    n_feature, n_hidden, n_out = 2, 32, 2
    x0 = 2.0 + jax.random.normal(k_data0, (100, n_feature), jnp.float32)
    x1 = -2.0 + jax.random.normal(k_data1, (100, n_feature), jnp.float32)
    x = jnp.concatenate([x0, x1], axis=0)   # (200, 2)

    w1, b1, w2, b2 = init_params(k_params, n_feature, n_hidden, n_out)
    packed = pack_params(w1, b1, w2, b2)    # single parameter buffer, built once

    out = net_forward(x, packed, n_hidden=n_hidden, n_out=n_out)
    out = jax.block_until_ready(out)

    # Pure-JAX reference (PyTorch-layout weights): relu(x @ W1^T + b1) @ W2^T + b2
    ref = jnp.maximum(x @ w1.T + b1, 0.0) @ w2.T + b2
    assert out.shape == (200, n_out)
    assert jnp.allclose(out, ref, atol=1e-4, rtol=1e-4)

    print("KERNEL_OK")
</pallas_src>

<mosaic_0001>
module attributes {stable_mosaic.version = 11 : i64} {
  func.func @_mlp_kernel(%arg0: memref<2x256xf32, #tpu.memory_space<vmem>>, %arg1: memref<40x128xf32, #tpu.memory_space<vmem>>, %arg2: memref<2x256xf32, #tpu.memory_space<vmem>>) attributes {dimension_semantics = [], scalar_prefetch = 0 : i64, scratch_operands = 0 : i64, tpu.core_type = #tpu.core_type<tc>} {
    %c0 = arith.constant 0 : index
    %c0_0 = arith.constant 0 : index
    %0 = vector.load %arg0[%c0, %c0_0] : memref<2x256xf32, #tpu.memory_space<vmem>>, vector<2x256xf32>
    %c0_1 = arith.constant 0 : index
    %c0_2 = arith.constant 0 : index
    %1 = vector.load %arg1[%c0_1, %c0_2] : memref<40x128xf32, #tpu.memory_space<vmem>>, vector<32x1xf32>
    %2 = vector.extract_strided_slice %0 {offsets = [0, 0], sizes = [1, 256], strides = [1, 1]} : vector<2x256xf32> to vector<1x256xf32>
    %3 = vector.broadcast %1 : vector<32x1xf32> to vector<32x256xf32>
    %4 = vector.broadcast %2 : vector<1x256xf32> to vector<32x256xf32>
    %5 = arith.mulf %3, %4 : vector<32x256xf32>
    %c0_3 = arith.constant 0 : index
    %c2 = arith.constant 2 : index
    %6 = vector.load %arg1[%c0_3, %c2] : memref<40x128xf32, #tpu.memory_space<vmem>>, vector<32x1xf32>
    %7 = vector.broadcast %6 : vector<32x1xf32> to vector<32x256xf32>
    %8 = arith.addf %5, %7 : vector<32x256xf32>
    %c0_4 = arith.constant 0 : index
    %c1 = arith.constant 1 : index
    %9 = vector.load %arg1[%c0_4, %c1] : memref<40x128xf32, #tpu.memory_space<vmem>>, vector<32x1xf32>
    %10 = vector.extract_strided_slice %0 {offsets = [1, 0], sizes = [1, 256], strides = [1, 1]} : vector<2x256xf32> to vector<1x256xf32>
    %11 = vector.broadcast %9 : vector<32x1xf32> to vector<32x256xf32>
    %12 = vector.broadcast %10 : vector<1x256xf32> to vector<32x256xf32>
    %13 = arith.mulf %11, %12 : vector<32x256xf32>
    %14 = arith.addf %8, %13 : vector<32x256xf32>
    %cst = arith.constant 0.000000e+00 : f32
    %15 = vector.broadcast %cst : f32 to vector<32x256xf32>
    %16 = arith.maximumf %14, %15 : vector<32x256xf32>
    %c32 = arith.constant 32 : index
    %c0_5 = arith.constant 0 : index
    %17 = vector.load %arg1[%c32, %c0_5] : memref<40x128xf32, #tpu.memory_space<vmem>>, vector<2x32xf32>
    %c32_6 = arith.constant 32 : index
    %c32_7 = arith.constant 32 : index
    %18 = vector.load %arg1[%c32_6, %c32_7] : memref<40x128xf32, #tpu.memory_space<vmem>>, vector<2x1xf32>
    %cst_8 = arith.constant dense<0.000000e+00> : vector<2x256xf32>
    %19 = tpu.matmul %17, %16, %cst_8 {dimension_numbers = #tpu.dot_dimension_numbers<[1], [0], [0], [1], [0, 0, 1, 1], [], []>} : vector<2x32xf32>, vector<32x256xf32>, vector<2x256xf32> -> vector<2x256xf32>
    %20 = vector.broadcast %18 : vector<2x1xf32> to vector<2x256xf32>
    %21 = arith.addf %19, %20 : vector<2x256xf32>
    %c0_9 = arith.constant 0 : index
    %c0_10 = arith.constant 0 : index
    %22 = vector.load %arg2[%c0_9, %c0_10] : memref<2x256xf32, #tpu.memory_space<vmem>>, vector<2x256xf32>
    tpu.vector_store %arg2[%c0_9, %c0_10], %21 {strides = array<i32>} : memref<2x256xf32, #tpu.memory_space<vmem>>, vector<2x256xf32>,
    return
  }
}

</mosaic_0001>

<llo_original>
// kernel: net_forward.2
$region0: #{net_forward.2}
  #allocation0 [shape = 'u32[]', space=smem, size = 0x4, offset = 0x4, fixed_abs, tag = 'smem constant byte address 0x4 - core index']
  #allocation1 [shape = 'u32[144,128]{1,0:T(1,128)}', space=vmem, size = 0x12000, scoped, tag = 'internal scratch']
  #allocation2 [shape = 'u32[2048]{0}', space=vmem, size = 0x2000, scoped, tag = 'scoped memory for net_forward.2']
  #allocation3 [shape = 'u32[2048]{0}', space=vmem, size = 0x2000, scoped, tag = 'scoped memory for net_forward.2']
  #allocation4 [shape = 'u32[2048]{0}', space=vmem, size = 0x2000, scoped, tag = 'scoped memory for net_forward.2']
  #allocation5 [shape = 'u32[2048]{0}', space=vmem, size = 0x2000, scoped, tag = 'scoped memory for net_forward.2']
  #allocation6 [shape = 'u32[2048]{0}', space=vmem, size = 0x2000, scoped, tag = 'scoped memory for net_forward.2']
  %s0 = inlined_call_operand.hbm [shape: f32[40,128], index: 0, kind: input, shape index: {}]
  %s1 = inlined_call_operand.hbm [shape: f32[2,200], index: 1, kind: input, shape index: {}]
  %s2 = inlined_call_operand.<no memory space> [shape: f32[], index: 2, kind: input, shape index: {}]
  %s3 = inlined_call_operand.vmem [shape: f32[2,256], index: 3, kind: output, shape index: {}]
  %s4 = sld [smem:[#allocation0]]
  $region26: #{net_forward.2} parent=0
    _
  %s6 = ssub.s32 1, %s4
  %s7 = scalar_select 0, %s6, %s4
  %v8 = vstv %s2
  $region1: #{net_forward.2} parent=0
    #allocation7 [shape = 'u8[2048]{0}', space=vmem, size = 0x800, scoped, tag = 'operand span for operand 1']
    #allocation8 [shape = 's32[1]{0}', space=sflag, size = 0x4, scoped, tag = 'scoped memory for net_forward.2']
    #allocation9 [shape = 'u8[20480]{0}', space=vmem, size = 0x5000, scoped, tag = 'input window, operand 1, single buffered']
    #allocation10 [shape = 's32[1]{0}', space=sflag, size = 0x4, scoped, tag = 'scoped memory for net_forward.2']
    #allocation11 [shape = 'u8[2048]{0}', space=vmem, size = 0x800, dematerialized = true, scoped, tag = 'FusionAdapter Buffer %fusion.1 = f32[2,256]{1,0:T(2,128)} fusion(%param_1.1, %param_2), kind=kLoop, calls=%fused_computation.2.clone, metadata={op_name="jit(net_forward)/jit(_pad)/pad" stack_frame_id=8}']
    %9 = vsyncpa [#allocation8], 0
    %10 = vsyncpa [#allocation10], 0
    // Predicated region
    $region2: #{net_forward.2} parent=1 // pred_check
      _
    $region3: #{net_forward.2} parent=1 // pred_check_branch
      %12 = sbr.rel (0) target = $region5
    $region4: #{net_forward.2} parent=1 // pred_region
      %s14 = ssub.s32 64, 64
      %15 = vsyncadd [#allocation8], %s14
      %s17 = sshll.u32 [#allocation7], 4
      %s18 = int_to_ptr.vmem [resolvable:$true] %s17
      %20 = dma.hbm_to_vmem [thread:$0]  %s1, 64, %s18, [#allocation8]
    $region5: #{net_forward.2} parent=1 // pred_fallthru
      _
    // Predicated region
    $region6: #{net_forward.2} parent=1 // pred_check
      _
    $region7: #{net_forward.2} parent=1 // pred_check_branch
      %22 = sbr.rel (0) target = $region9
    $region8: #{net_forward.2} parent=1 // pred_region
      %s24 = ssub.s32 640, 640
      %25 = vsyncadd [#allocation10], %s24
      %s26 = sshll.u32 [#allocation9], 4
      %s27 = int_to_ptr.vmem [resolvable:$true] %s26
      %32 = dma.hbm_to_vmem [thread:$0]  %s0, 640, %s27, [#allocation10], 128, 128, 8
    $region9: #{net_forward.2} parent=1 // pred_fallthru
      _
    // Predicated region
    $region10: #{net_forward.2} parent=1 // pred_check
      _
    $region11: #{net_forward.2} parent=1 // pred_check_branch
      %34 = sbr.rel (0) target = $region13
    $region12: #{net_forward.2} parent=1 // pred_region
      %35 = dma.done [#allocation8], 64
    $region13: #{net_forward.2} parent=1 // pred_fallthru
      _
    // Predicated region
    $region14: #{net_forward.2} parent=1 // pred_check
      _
    $region15: #{net_forward.2} parent=1 // pred_check_branch
      %37 = sbr.rel (0) target = $region17
    $region16: #{net_forward.2} parent=1 // pred_region
      %38 = dma.done [#allocation10], 640
    $region17: #{net_forward.2} parent=1 // pred_fallthru
      _
    %v39 = vld [vmem:[#allocation7] sm:$0x3]
    %v40 = vlaneseq
    %v41 = vshrl.u32 %v40, 7
    %vm43 = vcmp.lt.s32.totalorder %v41, 2
    %v44 = vsel %vm43, %v39, %v8
    %v45 = vlaneseq
    %v46 = vand.u32 %v45, 127
    %vm48 = vcmp.lt.s32.totalorder %v46, 200
    %v49 = vsel %vm48, %v44, %v8
    %51 = vst [vmem:[#allocation11] sm:$0x3] %v49
    %s52 = scalar_lea.vmem [#allocation7], 2
    %v53 = vld [vmem:[%s52] sm:$0x3]
    %v54 = vlaneseq
    %v55 = vshrl.u32 %v54, 7
    %vm57 = vcmp.lt.s32.totalorder %v55, 2
    %v58 = vsel %vm57, %v53, %v8
    %v59 = vlaneseq
    %v60 = vand.u32 %v59, 127
    %v61 = vadd.s32 %v60, 128
    %vm62 = vcmp.lt.s32.totalorder %v61, 200
    %v63 = vsel %vm62, %v58, %v8
    %s64 = scalar_lea.vmem [#allocation11], 2
    %66 = vst [vmem:[%s64] sm:$0x3] %v63
    %v67 = vld [vmem:[#allocation11] sm:$0xf]
    %v68 = vld [vmem:[#allocation9] sm:$0xff]
    %v69 = vld [vmem:[#allocation9 + $0x8] sm:$0xff]
    %v70 = vld [vmem:[#allocation9 + $0x10] sm:$0xff]
    %v71 = vld [vmem:[#allocation9 + $0x18] sm:$0xff]
    %73 = vset.pattern.permute.xlu0 0
    %74 = vperm.xlu0 %73, %v68
    %v75 = vpop.permute.xlu0 %74
    %78 = vset.pattern.permute.xlu0 0
    %79 = vperm.xlu0 %78, %v69
    %v80 = vpop.permute.xlu0 %79
    %83 = vset.pattern.permute.xlu0 0
    %84 = vperm.xlu0 %83, %v70
    %v85 = vpop.permute.xlu0 %84
    %88 = vset.pattern.permute.xlu0 0
    %89 = vperm.xlu0 %88, %v71
    %v90 = vpop.permute.xlu0 %89
    %v93 = vlaneseq
    %v94 = vshrl.u32 %v93, 7
    %v95 = vsub.s32 0, %v94
    %v96 = vrot.slane %v67, %v95
    %v97 = vlaneseq
    %v98 = vshrl.u32 %v97, 7
    %v99 = vsub.s32 2, %v98
    %v100 = vrot.slane %v67, %v99
    %v103 = vlaneseq
    %v104 = vshrl.u32 %v103, 7
    %v105 = vsub.s32 0, %v104
    %v106 = vrot.slane %v96, %v105
    %v107 = vlaneseq
    %v108 = vshrl.u32 %v107, 7
    %v109 = vsub.s32 0, %v108
    %v110 = vrot.slane %v100, %v109
    %v111 = vmul.f32 %v75, %v106
    %v112 = vmul.f32 %v75, %v110
    %v113 = vmul.f32 %v80, %v106
    %v114 = vmul.f32 %v80, %v110
    %v115 = vmul.f32 %v85, %v106
    %v116 = vmul.f32 %v85, %v110
    %v117 = vmul.f32 %v90, %v106
    %v118 = vmul.f32 %v90, %v110
    %119 = vset.pattern.permute.xlu0 2
    %120 = vperm.xlu0 %119, %v68
    %v121 = vpop.permute.xlu0 %120
    %123 = vset.pattern.permute.xlu0 2
    %124 = vperm.xlu0 %123, %v69
    %v125 = vpop.permute.xlu0 %124
    %127 = vset.pattern.permute.xlu0 2
    %128 = vperm.xlu0 %127, %v70
    %v129 = vpop.permute.xlu0 %128
    %131 = vset.pattern.permute.xlu0 2
    %132 = vperm.xlu0 %131, %v71
    %v133 = vpop.permute.xlu0 %132
    %v135 = vadd.f32 %v111, %v121
    %v136 = vadd.f32 %v112, %v121
    %v137 = vadd.f32 %v113, %v125
    %v138 = vadd.f32 %v114, %v125
    %v139 = vadd.f32 %v115, %v129
    %v140 = vadd.f32 %v116, %v129
    %v141 = vadd.f32 %v117, %v133
    %v142 = vadd.f32 %v118, %v133
    %143 = vset.pattern.permute.xlu0 1
    %144 = vperm.xlu0 %143, %v68
    %v145 = vpop.permute.xlu0 %144
    %147 = vset.pattern.permute.xlu0 1
    %148 = vperm.xlu0 %147, %v69
    %v149 = vpop.permute.xlu0 %148
    %151 = vset.pattern.permute.xlu0 1
    %152 = vperm.xlu0 %151, %v70
    %v153 = vpop.permute.xlu0 %152
    %155 = vset.pattern.permute.xlu0 1
    %156 = vperm.xlu0 %155, %v71
    %v157 = vpop.permute.xlu0 %156
    %v159 = vlaneseq
    %v160 = vshrl.u32 %v159, 7
    %v161 = vsub.s32 1, %v160
    %v162 = vrot.slane %v67, %v161
    %v163 = vlaneseq
    %v164 = vshrl.u32 %v163, 7
    %v165 = vsub.s32 3, %v164
    %v166 = vrot.slane %v67, %v165
    %v169 = vlaneseq
    %v170 = vshrl.u32 %v169, 7
    %v171 = vsub.s32 1, %v170
    %v172 = vrot.slane %v162, %v171
    %v173 = vlaneseq
    %v174 = vshrl.u32 %v173, 7
    %v175 = vsub.s32 1, %v174
    %v176 = vrot.slane %v166, %v175
    %v177 = vmul.f32 %v145, %v172
    %v178 = vmul.f32 %v145, %v176
    %v179 = vmul.f32 %v149, %v172
    %v180 = vmul.f32 %v149, %v176
    %v181 = vmul.f32 %v153, %v172
    %v182 = vmul.f32 %v153, %v176
    %v183 = vmul.f32 %v157, %v172
    %v184 = vmul.f32 %v157, %v176
    %v185 = vadd.f32 %v135, %v177
    %v186 = vadd.f32 %v136, %v178
    %v187 = vadd.f32 %v137, %v179
    %v188 = vadd.f32 %v138, %v180
    %v189 = vadd.f32 %v139, %v181
    %v190 = vadd.f32 %v140, %v182
    %v191 = vadd.f32 %v141, %v183
    %v192 = vadd.f32 %v142, %v184
    %v193 = vmax.f32 %v185, 0.0
    %v194 = vmax.f32 %v186, 0.0
    %v195 = vmax.f32 %v187, 0.0
    %v196 = vmax.f32 %v188, 0.0
    %v197 = vmax.f32 %v189, 0.0
    %v198 = vmax.f32 %v190, 0.0
    %v199 = vmax.f32 %v191, 0.0
    %v200 = vmax.f32 %v192, 0.0
    %v201 = vld [vmem:[#allocation9 + $0x20] sm:$0x3]
    %203 = vset.pattern.permute.xlu0 32
    %204 = vperm.xlu0 %203, %v201
    %v205 = vpop.permute.xlu0 %204
    %vm207 = vcmask 261120
    %v208 = vsel %vm207, %v201, 0
    %210 = vmatprep.subr.mxu0 %v194
    %211 = vmatpush1.msra.mxu0 %v193
    %212 = vmatprep.subr.mxu0 %v196
    %213 = vmatpush1.msra.mxu0 %v195
    %214 = vmatprep.subr.mxu0 %v198
    %215 = vmatpush1.msra.mxu0 %v197
    %216 = vmatprep.subr.mxu0 %v200
    %217 = vmatpush1.msra.mxu0 %v199
    %218 = vmatprep.subr.mxu0 0.0
    %219 = vmatpush1.msra.mxu0 0.0
    %220 = vmatprep.subr.mxu0 0.0
    %221 = vmatpush1.msra.mxu0 0.0
    %222 = vmatprep.subr.mxu0 0.0
    %223 = vmatpush1.msra.mxu0 0.0
    %224 = vmatprep.subr.mxu0 0.0
    %225 = vmatpush1.msra.mxu0 0.0
    %226 = vmatprep.subr.mxu0 0.0
    %227 = vmatpush1.msra.mxu0 0.0
    %228 = vmatprep.subr.mxu0 0.0
    %229 = vmatpush1.msra.mxu0 0.0
    %230 = vmatprep.subr.mxu0 0.0
    %231 = vmatpush1.msra.mxu0 0.0
    %232 = vmatprep.subr.mxu0 0.0
    %233 = vmatpush1.msra.mxu0 0.0
    %234 = vmatprep.subr.mxu0 0.0
    %235 = vmatpush1.msra.mxu0 0.0
    %236 = vmatprep.subr.mxu0 0.0
    %237 = vmatpush1.msra.mxu0 0.0
    %238 = vmatprep.subr.mxu0 0.0
    %239 = vmatpush1.msra.mxu0 0.0
    %240 = vmatprep.subr.mxu0 0.0
    %241 = vmatpush1.msra.mxu0 0.0
    %242 = vmatprep.subr.mxu0 0.0
    %243 = vmatpush1.msra.mxu0 0.0
    %244 = vmatprep.subr.mxu0 0.0
    %245 = vmatpush1.msra.mxu0 0.0
    %246 = vmatprep.subr.mxu0 0.0
    %247 = vmatpush1.msra.mxu0 0.0
    %248 = vmatprep.subr.mxu0 0.0
    %249 = vmatpush1.msra.mxu0 0.0
    %250 = vmatprep.subr.mxu0 0.0
    %251 = vmatpush1.msra.mxu0 0.0
    %252 = vmatprep.subr.mxu0 0.0
    %253 = vmatpush1.msra.mxu0 0.0
    %254 = vmatprep.subr.mxu0 0.0
    %255 = vmatpush1.msra.mxu0 0.0
    %256 = vmatprep.subr.mxu0 0.0
    %257 = vmatpush1.msra.mxu0 0.0
    %258 = vmatprep.subr.mxu0 0.0
    %259 = vmatpush1.msra.mxu0 0.0
    %260 = vmatprep.subr.mxu0 0.0
    %261 = vmatpush1.msra.mxu0 0.0
    %262 = vmatprep.subr.mxu0 0.0
    %263 = vmatpush1.msra.mxu0 0.0
    %264 = vmatprep.subr.mxu0 0.0
    %265 = vmatpush1.msra.mxu0 0.0
    %266 = vmatprep.subr.mxu0 0.0
    %267 = vmatpush1.msra.mxu0 0.0
    %268 = vmatprep.subr.mxu0 0.0
    %269 = vmatpush1.msra.mxu0 0.0
    %270 = vmatprep.subr.mxu0 0.0
    %271 = vmatpush1.msra.mxu0 0.0
    %272 = vmatprep.subr.mxu0 0.0
    %273 = vmatpush1.msra.mxu0 0.0
    %274 = vmatprep.mubr.f32.mxu0 0.0
    %275 = vmatmul.mubr.f32.gmra.mrb[0].mxu0 %v208
    %v276 = vpop.f32.mrb[0].mxu0
    %v277 = vadd.f32 %v205, %v276
    %v278 = vpop.f32.mrb[0].mxu0
    %v279 = vadd.f32 %v205, %v278
    %280 = vdwg.mxu0
    %v283 = vcombine.low %v277, %v279
    %v285 = vunpack.c.l.s4 1983009808
    %v286 = vunpack.c.0.s8 %v285
    %v287 = vlaneseq
    %v288 = vshrl.u32 %v287, 7
    %v289 = vsub.s32 %v286, %v288
    %v290 = vrot.slane %v283, %v289
    %292 = vst [vmem:[%s3] sm:$0xf] %v290
    // Predicated region
    $region18: #{net_forward.2} parent=1 // pred_check
      _
    $region19: #{net_forward.2} parent=1 // pred_check_branch
      %294 = sbr.rel (0) target = $region21
    $region20: #{net_forward.2} parent=1 // pred_region
      _
    $region21: #{net_forward.2} parent=1 // pred_fallthru
      _
    // Predicated region
    $region22: #{net_forward.2} parent=1 // pred_check
      _
    $region23: #{net_forward.2} parent=1 // pred_check_branch
      %296 = sbr.rel (0) target = $region25
    $region24: #{net_forward.2} parent=1 // pred_region
      _
    $region25: #{net_forward.2} parent=1 // pred_fallthru
      _
    %297 = vsyncpa [#allocation8], 1
    %298 = vsyncpa [#allocation10], 1

</llo_original>
